<compile_context>
chip_gen: v6e
topology: v6e:2x2x1
jax: 0.10.0
libtpu: 0.0.40
codegen_flags: <defaults>
</compile_context>

<pallas_src>
import functools

import jax
import jax.numpy as jnp
from jax import lax
from jax.experimental import pallas as pl
from jax.experimental.pallas import tpu as pltpu


def _self_attn_kernel(x_ref, wq_ref, bq_ref, wk_ref, bk_ref, wv_ref, bv_ref,
                      mk_ref, mv_ref, o_ref, *, batch, hist_l, h_att):
    # x_ref : (B*L, D)       wq/wk : (D, H*E)    bq/bk : (1, H*E)
    # wv    : (D, H*Ev)      bv    : (1, H*Ev)
    # mk    : (H*L, H*E)     mv    : (H*L, H*Ev)   (0/1 block-diagonal masks)
    # o_ref : (B*L, H*Ev)
    L = hist_l
    H = h_att

    x = x_ref[...]                                                   # (B*L, D)

    # Fused lane-dense projections: all batch rows and all heads in one matmul.
    q_all = jnp.dot(x, wq_ref[...], preferred_element_type=jnp.float32) + bq_ref[...]
    k_all = jnp.dot(x, wk_ref[...], preferred_element_type=jnp.float32) + bk_ref[...]
    v_all = jnp.dot(x, wv_ref[...], preferred_element_type=jnp.float32) + bv_ref[...]

    mk = mk_ref[...]                                                 # (H*L, H*E)
    mv = mv_ref[...]                                                 # (H*L, H*Ev)

    outs = []
    for b in range(batch):                 # static unroll (batch is a Python int)
        qb = q_all[b * L:(b + 1) * L, :]                             # (L, H*E)
        kb = k_all[b * L:(b + 1) * L, :]                             # (L, H*E)
        vb = v_all[b * L:(b + 1) * L, :]                             # (L, H*Ev)

        # Block-diagonal K / V: one sublane tile + one mask multiply each.
        kbd = jnp.concatenate([kb] * H, axis=0) * mk                 # (H*L, H*E)
        vbd = jnp.concatenate([vb] * H, axis=0) * mv                 # (H*L, H*Ev)

        # Packed per-head scores in one MXU pass:
        #   s[q, h*L + j] = <q_h[q, :], k_h[j, :]>
        s = lax.dot_general(qb, kbd, (((1,), (1,)), ((), ())),
                            preferred_element_type=jnp.float32)      # (L, H*L)
        a = jnp.where(s >= 0, s, 0.1 * s)                            # leaky_relu(0.1)

        # torch Softmax(dim=1): normalize over the query axis (axis 0 here),
        # independently for every (head, key) lane column.
        m = jnp.max(a, axis=0, keepdims=True)
        e = jnp.exp(a - m)
        inv = pl.reciprocal(jnp.sum(e, axis=0, keepdims=True), approx=False)
        att = e * inv                                                # (L, H*L)

        # Packed att @ v for all heads at once; columns already in
        # torch.cat(dim=-1) order.
        outs.append(jnp.dot(att, vbd, preferred_element_type=jnp.float32))  # (L, H*Ev)

    # Single (B*L, H*Ev) store; final relu is elementwise.
    o_ref[...] = jnp.maximum(jnp.concatenate(outs, axis=0), 0.0)


def prepare_params(params, *, hist_l, h_att):
    """One-time weight fusion + block-diagonal masks (hoisted out of forward)."""
    H, D, E = params["wq"].shape
    Ev = params["wv"].shape[-1]
    L = hist_l
    assert H == h_att

    # Column h*E+e of wq_all is head h's e-th output column, so
    # q_all[:, h*E:(h+1)*E] == x @ wq[h] + bq[h].
    wq_all = jnp.transpose(params["wq"], (1, 0, 2)).reshape(D, H * E)
    wk_all = jnp.transpose(params["wk"], (1, 0, 2)).reshape(D, H * E)
    wv_all = jnp.transpose(params["wv"], (1, 0, 2)).reshape(D, H * Ev)
    bq_all = params["bq"].reshape(1, H * E)
    bk_all = params["bk"].reshape(1, H * E)
    bv_all = params["bv"].reshape(1, H * Ev)

    # Block-diagonal selection masks: row block h keeps only head-h columns.
    row_head = jnp.arange(H * L)[:, None] // L                       # (H*L, 1)
    mk = (row_head == (jnp.arange(H * E)[None, :] // E)).astype(jnp.float32)
    mv = (row_head == (jnp.arange(H * Ev)[None, :] // Ev)).astype(jnp.float32)

    return dict(wq=wq_all, bq=bq_all, wk=wk_all, bk=bk_all,
                wv=wv_all, bv=bv_all, mk=mk, mv=mv)


@functools.partial(jax.jit, static_argnames=("hist_l", "h_att", "emb_dim"))
def self_attention_forward(hid, prep, *, hist_l, h_att, emb_dim):
    B, in_dim = hid.shape
    D = in_dim // hist_l
    L = hist_l
    E = emb_dim                 # per-head q/k output dim
    Ev = emb_dim // h_att       # per-head v output dim
    BL, HE, HEv, HL = B * L, h_att * E, h_att * Ev, h_att * L

    x = hid.reshape(BL, D)      # fold batch into the sublane axis (free view)

    kernel = functools.partial(_self_attn_kernel, batch=B, hist_l=L, h_att=h_att)

    out = pl.pallas_call(
        kernel,
        out_shape=jax.ShapeDtypeStruct((BL, HEv), jnp.float32),
        grid_spec=pltpu.PrefetchScalarGridSpec(
            num_scalar_prefetch=0,
            grid=(1,),                                   # single step: overhead-bound regime
            in_specs=[
                pl.BlockSpec((BL, D), lambda i: (0, 0)),     # x
                pl.BlockSpec((D, HE), lambda i: (0, 0)),     # Wq_all
                pl.BlockSpec((1, HE), lambda i: (0, 0)),     # bq_all
                pl.BlockSpec((D, HE), lambda i: (0, 0)),     # Wk_all
                pl.BlockSpec((1, HE), lambda i: (0, 0)),     # bk_all
                pl.BlockSpec((D, HEv), lambda i: (0, 0)),    # Wv_all
                pl.BlockSpec((1, HEv), lambda i: (0, 0)),    # bv_all
                pl.BlockSpec((HL, HE), lambda i: (0, 0)),    # block-diag K mask
                pl.BlockSpec((HL, HEv), lambda i: (0, 0)),   # block-diag V mask
            ],
            out_specs=pl.BlockSpec((BL, HEv), lambda i: (0, 0)),
        ),
        compiler_params=pltpu.CompilerParams(
            dimension_semantics=("arbitrary",)),
    )(x, prep["wq"], prep["bq"], prep["wk"], prep["bk"],
      prep["wv"], prep["bv"], prep["mk"], prep["mv"])

    # (B*L, H*Ev) rows are (b, l)-major -> reshape to (B, L*H*Ev) is the same
    # flattening the module's .view(B, -1) performs.
    return out.reshape(B, L * HEv)


def init_params(key, *, D, E, Ev, H):
    ks = jax.random.split(key, 6)
    s = 1.0 / jnp.sqrt(jnp.float32(D))  # mimic nn.Linear's U(-1/sqrt(fan_in), ...)
    return {
        "wq": jax.random.uniform(ks[0], (H, D, E), jnp.float32, -s, s),
        "bq": jax.random.uniform(ks[1], (H, 1, E), jnp.float32, -s, s),
        "wk": jax.random.uniform(ks[2], (H, D, E), jnp.float32, -s, s),
        "bk": jax.random.uniform(ks[3], (H, 1, E), jnp.float32, -s, s),
        "wv": jax.random.uniform(ks[4], (H, D, Ev), jnp.float32, -s, s),
        "bv": jax.random.uniform(ks[5], (H, 1, Ev), jnp.float32, -s, s),
    }


def reference_forward(hid, params, *, hist_l, h_att, emb_dim):
    """Pure-JAX reference mirroring the PyTorch forward exactly."""
    B, in_dim = hid.shape
    D = in_dim // hist_l
    x = hid.reshape(B, hist_l, D)
    outs = []
    for h in range(h_att):
        q = x @ params["wq"][h] + params["bq"][h]
        k = x @ params["wk"][h] + params["bk"][h]
        s = jnp.einsum("bld,bmd->blm", q, k)
        a = jnp.where(s >= 0, s, 0.1 * s)
        att = jax.nn.softmax(a, axis=1)           # torch Softmax(dim=1)
        v = x @ params["wv"][h] + params["bv"][h]
        outs.append(jnp.einsum("blm,bmv->blv", att, v))
    ans = jnp.concatenate(outs, axis=-1)
    return jax.nn.relu(ans).reshape(B, -1)


if __name__ == "__main__":
    # Module hyper-params: in_dim=256, hist_l=8 -> per-step feature D=32,
    # emb_dim=32, h_att=8 -> per-head value dim Ev=4.
    B, hist_l, in_dim, emb_dim, h_att = 2, 8, 256, 32, 8
    D = in_dim // hist_l
    E = emb_dim
    Ev = emb_dim // h_att

    key = jax.random.PRNGKey(0)
    k_x, k_p = jax.random.split(key)
    hid = jax.random.normal(k_x, (B, in_dim), jnp.float32)
    params = init_params(k_p, D=D, E=E, Ev=Ev, H=h_att)

    # Weight fusion / mask construction runs once (init/param-load time).
    prep = prepare_params(params, hist_l=hist_l, h_att=h_att)
    prep = jax.tree_util.tree_map(jax.block_until_ready, prep)

    out = self_attention_forward(hid, prep, hist_l=hist_l, h_att=h_att,
                                 emb_dim=emb_dim)
    out = jax.block_until_ready(out)

    ref = reference_forward(hid, params, hist_l=hist_l, h_att=h_att,
                            emb_dim=emb_dim)
    assert out.shape == (B, hist_l * emb_dim), out.shape
    assert jnp.allclose(out, ref, atol=1e-5, rtol=1e-5), "mismatch vs reference"

    print("KERNEL_OK")
</pallas_src>

<mosaic_0001>
module attributes {stable_mosaic.version = 11 : i64} {
  func.func @_self_attn_kernel(%arg0: i32, %arg1: memref<16x32xf32, #tpu.memory_space<vmem>>, %arg2: memref<32x256xf32, #tpu.memory_space<vmem>>, %arg3: memref<1x256xf32, #tpu.memory_space<vmem>>, %arg4: memref<32x256xf32, #tpu.memory_space<vmem>>, %arg5: memref<1x256xf32, #tpu.memory_space<vmem>>, %arg6: memref<32x32xf32, #tpu.memory_space<vmem>>, %arg7: memref<1x32xf32, #tpu.memory_space<vmem>>, %arg8: memref<64x256xf32, #tpu.memory_space<vmem>>, %arg9: memref<64x32xf32, #tpu.memory_space<vmem>>, %arg10: memref<16x32xf32, #tpu.memory_space<vmem>>) attributes {dimension_semantics = [#tpu.dimension_semantics<arbitrary>], iteration_bounds = array<i64: 1>, scalar_prefetch = 0 : i64, scratch_operands = 0 : i64, tpu.core_type = #tpu.core_type<tc>, window_params = [{pipeline_mode = #tpu.pipeline_mode<synchronous>, transform_indices = @transform_0, window_bounds = array<i64: 16, 32>}, {pipeline_mode = #tpu.pipeline_mode<synchronous>, transform_indices = @transform_1, window_bounds = array<i64: 32, 256>}, {pipeline_mode = #tpu.pipeline_mode<synchronous>, transform_indices = @transform_2, window_bounds = array<i64: 1, 256>}, {pipeline_mode = #tpu.pipeline_mode<synchronous>, transform_indices = @transform_3, window_bounds = array<i64: 32, 256>}, {pipeline_mode = #tpu.pipeline_mode<synchronous>, transform_indices = @transform_4, window_bounds = array<i64: 1, 256>}, {pipeline_mode = #tpu.pipeline_mode<synchronous>, transform_indices = @transform_5, window_bounds = array<i64: 32, 32>}, {pipeline_mode = #tpu.pipeline_mode<synchronous>, transform_indices = @transform_6, window_bounds = array<i64: 1, 32>}, {pipeline_mode = #tpu.pipeline_mode<synchronous>, transform_indices = @transform_7, window_bounds = array<i64: 64, 256>}, {pipeline_mode = #tpu.pipeline_mode<synchronous>, transform_indices = @transform_8, window_bounds = array<i64: 64, 32>}, {pipeline_mode = #tpu.pipeline_mode<synchronous>, transform_indices = @transform_9, window_bounds = array<i64: 16, 32>}]} {
    %c0 = arith.constant 0 : index
    %c0_0 = arith.constant 0 : index
    %0 = vector.load %arg1[%c0, %c0_0] : memref<16x32xf32, #tpu.memory_space<vmem>>, vector<16x32xf32>
    %c0_1 = arith.constant 0 : index
    %c0_2 = arith.constant 0 : index
    %1 = vector.load %arg2[%c0_1, %c0_2] : memref<32x256xf32, #tpu.memory_space<vmem>>, vector<32x256xf32>
    %cst = arith.constant dense<0.000000e+00> : vector<16x256xf32>
    %2 = tpu.matmul %0, %1, %cst {dimension_numbers = #tpu.dot_dimension_numbers<[1], [0], [0], [1], [0, 0, 1, 1], [], []>} : vector<16x32xf32>, vector<32x256xf32>, vector<16x256xf32> -> vector<16x256xf32>
    %c0_3 = arith.constant 0 : index
    %c0_4 = arith.constant 0 : index
    %3 = vector.load %arg3[%c0_3, %c0_4] : memref<1x256xf32, #tpu.memory_space<vmem>>, vector<1x256xf32>
    %4 = vector.broadcast %3 : vector<1x256xf32> to vector<16x256xf32>
    %5 = arith.addf %2, %4 : vector<16x256xf32>
    %c0_5 = arith.constant 0 : index
    %c0_6 = arith.constant 0 : index
    %6 = vector.load %arg4[%c0_5, %c0_6] : memref<32x256xf32, #tpu.memory_space<vmem>>, vector<32x256xf32>
    %cst_7 = arith.constant dense<0.000000e+00> : vector<16x256xf32>
    %7 = tpu.matmul %0, %6, %cst_7 {dimension_numbers = #tpu.dot_dimension_numbers<[1], [0], [0], [1], [0, 0, 1, 1], [], []>} : vector<16x32xf32>, vector<32x256xf32>, vector<16x256xf32> -> vector<16x256xf32>
    %c0_8 = arith.constant 0 : index
    %c0_9 = arith.constant 0 : index
    %8 = vector.load %arg5[%c0_8, %c0_9] : memref<1x256xf32, #tpu.memory_space<vmem>>, vector<1x256xf32>
    %9 = vector.broadcast %8 : vector<1x256xf32> to vector<16x256xf32>
    %10 = arith.addf %7, %9 : vector<16x256xf32>
    %c0_10 = arith.constant 0 : index
    %c0_11 = arith.constant 0 : index
    %11 = vector.load %arg6[%c0_10, %c0_11] : memref<32x32xf32, #tpu.memory_space<vmem>>, vector<32x32xf32>
    %cst_12 = arith.constant dense<0.000000e+00> : vector<16x32xf32>
    %12 = tpu.matmul %0, %11, %cst_12 {dimension_numbers = #tpu.dot_dimension_numbers<[1], [0], [0], [1], [0, 0, 1, 1], [], []>} : vector<16x32xf32>, vector<32x32xf32>, vector<16x32xf32> -> vector<16x32xf32>
    %c0_13 = arith.constant 0 : index
    %c0_14 = arith.constant 0 : index
    %13 = vector.load %arg7[%c0_13, %c0_14] : memref<1x32xf32, #tpu.memory_space<vmem>>, vector<1x32xf32>
    %14 = vector.broadcast %13 : vector<1x32xf32> to vector<16x32xf32>
    %15 = arith.addf %12, %14 : vector<16x32xf32>
    %c0_15 = arith.constant 0 : index
    %c0_16 = arith.constant 0 : index
    %16 = vector.load %arg8[%c0_15, %c0_16] : memref<64x256xf32, #tpu.memory_space<vmem>>, vector<64x256xf32>
    %c0_17 = arith.constant 0 : index
    %c0_18 = arith.constant 0 : index
    %17 = vector.load %arg9[%c0_17, %c0_18] : memref<64x32xf32, #tpu.memory_space<vmem>>, vector<64x32xf32>
    %18 = vector.extract_strided_slice %5 {offsets = [0, 0], sizes = [8, 256], strides = [1, 1]} : vector<16x256xf32> to vector<8x256xf32>
    %19 = vector.extract_strided_slice %10 {offsets = [0, 0], sizes = [8, 256], strides = [1, 1]} : vector<16x256xf32> to vector<8x256xf32>
    %20 = vector.extract_strided_slice %15 {offsets = [0, 0], sizes = [8, 32], strides = [1, 1]} : vector<16x32xf32> to vector<8x32xf32>
    %21 = tpu.concatenate %19, %19, %19, %19, %19, %19, %19, %19 in 0 : vector<8x256xf32>, vector<8x256xf32>, vector<8x256xf32>, vector<8x256xf32>, vector<8x256xf32>, vector<8x256xf32>, vector<8x256xf32>, vector<8x256xf32> -> vector<64x256xf32>
    %22 = arith.mulf %21, %16 : vector<64x256xf32>
    %23 = tpu.concatenate %20, %20, %20, %20, %20, %20, %20, %20 in 0 : vector<8x32xf32>, vector<8x32xf32>, vector<8x32xf32>, vector<8x32xf32>, vector<8x32xf32>, vector<8x32xf32>, vector<8x32xf32>, vector<8x32xf32> -> vector<64x32xf32>
    %24 = arith.mulf %23, %17 : vector<64x32xf32>
    %cst_19 = arith.constant dense<0.000000e+00> : vector<8x64xf32>
    %25 = tpu.matmul %18, %22, %cst_19 {dimension_numbers = #tpu.dot_dimension_numbers<[1], [1], [0], [0], [0, 0, 1, 0], [], []>} : vector<8x256xf32>, vector<64x256xf32>, vector<8x64xf32> -> vector<8x64xf32>
    %cst_20 = arith.constant 0.000000e+00 : f32
    %26 = vector.broadcast %cst_20 : f32 to vector<8x64xf32>
    %27 = arith.cmpf oge, %25, %26 : vector<8x64xf32>
    %cst_21 = arith.constant 1.000000e-01 : f32
    %28 = vector.broadcast %cst_21 : f32 to vector<8x64xf32>
    %29 = arith.mulf %28, %25 : vector<8x64xf32>
    %30 = arith.select %27, %25, %29 : vector<8x64xi1>, vector<8x64xf32>
    %cst_22 = arith.constant dense<0xFF800000> : vector<64xf32>
    %31 = vector.multi_reduction <maximumf>, %30, %cst_22 [0] : vector<8x64xf32> to vector<64xf32>
    %32 = vector.shape_cast %31 : vector<64xf32> to vector<1x64xf32>
    %33 = vector.broadcast %32 : vector<1x64xf32> to vector<8x64xf32>
    %34 = arith.subf %30, %33 : vector<8x64xf32>
    %35 = math.exp %34 : vector<8x64xf32>
    %cst_23 = arith.constant dense<0.000000e+00> : vector<64xf32>
    %36 = vector.multi_reduction <add>, %35, %cst_23 [0] : vector<8x64xf32> to vector<64xf32>
    %37 = vector.shape_cast %36 : vector<64xf32> to vector<1x64xf32>
    %38 = tpu.reciprocal %37 : vector<1x64xf32> -> vector<1x64xf32>
    %39 = vector.broadcast %38 : vector<1x64xf32> to vector<8x64xf32>
    %40 = arith.mulf %35, %39 : vector<8x64xf32>
    %cst_24 = arith.constant dense<0.000000e+00> : vector<8x32xf32>
    %41 = tpu.matmul %40, %24, %cst_24 {dimension_numbers = #tpu.dot_dimension_numbers<[1], [0], [0], [1], [0, 0, 1, 1], [], []>} : vector<8x64xf32>, vector<64x32xf32>, vector<8x32xf32> -> vector<8x32xf32>
    %42 = vector.extract_strided_slice %5 {offsets = [8, 0], sizes = [8, 256], strides = [1, 1]} : vector<16x256xf32> to vector<8x256xf32>
    %43 = vector.extract_strided_slice %10 {offsets = [8, 0], sizes = [8, 256], strides = [1, 1]} : vector<16x256xf32> to vector<8x256xf32>
    %44 = vector.extract_strided_slice %15 {offsets = [8, 0], sizes = [8, 32], strides = [1, 1]} : vector<16x32xf32> to vector<8x32xf32>
    %45 = tpu.concatenate %43, %43, %43, %43, %43, %43, %43, %43 in 0 : vector<8x256xf32>, vector<8x256xf32>, vector<8x256xf32>, vector<8x256xf32>, vector<8x256xf32>, vector<8x256xf32>, vector<8x256xf32>, vector<8x256xf32> -> vector<64x256xf32>
    %46 = arith.mulf %45, %16 : vector<64x256xf32>
    %47 = tpu.concatenate %44, %44, %44, %44, %44, %44, %44, %44 in 0 : vector<8x32xf32>, vector<8x32xf32>, vector<8x32xf32>, vector<8x32xf32>, vector<8x32xf32>, vector<8x32xf32>, vector<8x32xf32>, vector<8x32xf32> -> vector<64x32xf32>
    %48 = arith.mulf %47, %17 : vector<64x32xf32>
    %cst_25 = arith.constant dense<0.000000e+00> : vector<8x64xf32>
    %49 = tpu.matmul %42, %46, %cst_25 {dimension_numbers = #tpu.dot_dimension_numbers<[1], [1], [0], [0], [0, 0, 1, 0], [], []>} : vector<8x256xf32>, vector<64x256xf32>, vector<8x64xf32> -> vector<8x64xf32>
    %cst_26 = arith.constant 0.000000e+00 : f32
    %50 = vector.broadcast %cst_26 : f32 to vector<8x64xf32>
    %51 = arith.cmpf oge, %49, %50 : vector<8x64xf32>
    %cst_27 = arith.constant 1.000000e-01 : f32
    %52 = vector.broadcast %cst_27 : f32 to vector<8x64xf32>
    %53 = arith.mulf %52, %49 : vector<8x64xf32>
    %54 = arith.select %51, %49, %53 : vector<8x64xi1>, vector<8x64xf32>
    %cst_28 = arith.constant dense<0xFF800000> : vector<64xf32>
    %55 = vector.multi_reduction <maximumf>, %54, %cst_28 [0] : vector<8x64xf32> to vector<64xf32>
    %56 = vector.shape_cast %55 : vector<64xf32> to vector<1x64xf32>
    %57 = vector.broadcast %56 : vector<1x64xf32> to vector<8x64xf32>
    %58 = arith.subf %54, %57 : vector<8x64xf32>
    %59 = math.exp %58 : vector<8x64xf32>
    %cst_29 = arith.constant dense<0.000000e+00> : vector<64xf32>
    %60 = vector.multi_reduction <add>, %59, %cst_29 [0] : vector<8x64xf32> to vector<64xf32>
    %61 = vector.shape_cast %60 : vector<64xf32> to vector<1x64xf32>
    %62 = tpu.reciprocal %61 : vector<1x64xf32> -> vector<1x64xf32>
    %63 = vector.broadcast %62 : vector<1x64xf32> to vector<8x64xf32>
    %64 = arith.mulf %59, %63 : vector<8x64xf32>
    %cst_30 = arith.constant dense<0.000000e+00> : vector<8x32xf32>
    %65 = tpu.matmul %64, %48, %cst_30 {dimension_numbers = #tpu.dot_dimension_numbers<[1], [0], [0], [1], [0, 0, 1, 1], [], []>} : vector<8x64xf32>, vector<64x32xf32>, vector<8x32xf32> -> vector<8x32xf32>
    %66 = tpu.concatenate %41, %65 in 0 : vector<8x32xf32>, vector<8x32xf32> -> vector<16x32xf32>
    %cst_31 = arith.constant 0.000000e+00 : f32
    %67 = vector.broadcast %cst_31 : f32 to vector<16x32xf32>
    %68 = arith.maximumf %66, %67 : vector<16x32xf32>
    %c0_32 = arith.constant 0 : index
    %c0_33 = arith.constant 0 : index
    %69 = vector.load %arg10[%c0_32, %c0_33] : memref<16x32xf32, #tpu.memory_space<vmem>>, vector<16x32xf32>
    tpu.vector_store %arg10[%c0_32, %c0_33], %68 {strides = array<i32>} : memref<16x32xf32, #tpu.memory_space<vmem>>, vector<16x32xf32>,
    return
  }
  func.func @transform_0(%arg0: i32) -> (i32, i32) {
    %c0_i32 = arith.constant 0 : i32
    %c0_i32_0 = arith.constant 0 : i32
    %c0_i32_1 = arith.constant 0 : i32
    return %c0_i32, %c0_i32_0 : i32, i32
  }
  func.func @transform_1(%arg0: i32) -> (i32, i32) {
    %c0_i32 = arith.constant 0 : i32
    %c0_i32_0 = arith.constant 0 : i32
    %c0_i32_1 = arith.constant 0 : i32
    return %c0_i32, %c0_i32_0 : i32, i32
  }
  func.func @transform_2(%arg0: i32) -> (i32, i32) {
    %c0_i32 = arith.constant 0 : i32
    %c0_i32_0 = arith.constant 0 : i32
    %c0_i32_1 = arith.constant 0 : i32
    return %c0_i32, %c0_i32_0 : i32, i32
  }
  func.func @transform_3(%arg0: i32) -> (i32, i32) {
    %c0_i32 = arith.constant 0 : i32
    %c0_i32_0 = arith.constant 0 : i32
    %c0_i32_1 = arith.constant 0 : i32
    return %c0_i32, %c0_i32_0 : i32, i32
  }
  func.func @transform_4(%arg0: i32) -> (i32, i32) {
    %c0_i32 = arith.constant 0 : i32
    %c0_i32_0 = arith.constant 0 : i32
    %c0_i32_1 = arith.constant 0 : i32
    return %c0_i32, %c0_i32_0 : i32, i32
  }
  func.func @transform_5(%arg0: i32) -> (i32, i32) {
    %c0_i32 = arith.constant 0 : i32
    %c0_i32_0 = arith.constant 0 : i32
    %c0_i32_1 = arith.constant 0 : i32
    return %c0_i32, %c0_i32_0 : i32, i32
  }
  func.func @transform_6(%arg0: i32) -> (i32, i32) {
    %c0_i32 = arith.constant 0 : i32
    %c0_i32_0 = arith.constant 0 : i32
    %c0_i32_1 = arith.constant 0 : i32
    return %c0_i32, %c0_i32_0 : i32, i32
  }
  func.func @transform_7(%arg0: i32) -> (i32, i32) {
    %c0_i32 = arith.constant 0 : i32
    %c0_i32_0 = arith.constant 0 : i32
    %c0_i32_1 = arith.constant 0 : i32
    return %c0_i32, %c0_i32_0 : i32, i32
  }
  func.func @transform_8(%arg0: i32) -> (i32, i32) {
    %c0_i32 = arith.constant 0 : i32
    %c0_i32_0 = arith.constant 0 : i32
    %c0_i32_1 = arith.constant 0 : i32
    return %c0_i32, %c0_i32_0 : i32, i32
  }
  func.func @transform_9(%arg0: i32) -> (i32, i32) {
    %c0_i32 = arith.constant 0 : i32
    %c0_i32_0 = arith.constant 0 : i32
    %c0_i32_1 = arith.constant 0 : i32
    return %c0_i32, %c0_i32_0 : i32, i32
  }
}

</mosaic_0001>

<llo_original>
// kernel: self_attention_forward.1
$region0: #{self_attention_forward.1}
  #allocation0 [shape = 'u32[]', space=smem, size = 0x4, offset = 0x4, fixed_abs, tag = 'smem constant byte address 0x4 - core index']
  #allocation1 [shape = 'u32[144,128]{1,0:T(1,128)}', space=vmem, size = 0x12000, scoped, tag = 'internal scratch']
  %s0 = inlined_call_operand.vmem [shape: f32[16,32], index: 0, kind: input, shape index: {}]
  %s1 = inlined_call_operand.vmem [shape: f32[32,256], index: 1, kind: input, shape index: {}]
  %s2 = inlined_call_operand.hbm [shape: f32[1,256], index: 2, kind: input, shape index: {}]
  %s3 = inlined_call_operand.vmem [shape: f32[32,256], index: 3, kind: input, shape index: {}]
  %s4 = inlined_call_operand.hbm [shape: f32[1,256], index: 4, kind: input, shape index: {}]
  %s5 = inlined_call_operand.hbm [shape: f32[32,32], index: 5, kind: input, shape index: {}]
  %s6 = inlined_call_operand.hbm [shape: f32[1,32], index: 6, kind: input, shape index: {}]
  %s7 = inlined_call_operand.hbm [shape: f32[64,256], index: 7, kind: input, shape index: {}]
  %s8 = inlined_call_operand.vmem [shape: f32[64,32], index: 8, kind: input, shape index: {}]
  %s9 = inlined_call_operand.vmem [shape: f32[16,32], index: 9, kind: output, shape index: {}]
  %s10 = sld [smem:[#allocation0]]
  $region66: #{self_attention_forward.1} parent=0
    _
  %s12 = ssub.s32 1, %s10
  %s13 = scalar_select 0, %s12, %s10
  $region1: #{self_attention_forward.1} parent=0
    #allocation2 [shape = 'u8[1024]{0}', space=vmem, size = 0x400, scoped, tag = 'input window, operand 2, single buffered']
    #allocation3 [shape = 's32[1]{0}', space=sflag, size = 0x4, scoped, tag = 'scoped memory for self_attention_forward.1']
    #allocation4 [shape = 'u8[1024]{0}', space=vmem, size = 0x400, scoped, tag = 'input window, operand 4, single buffered']
    #allocation5 [shape = 's32[1]{0}', space=sflag, size = 0x4, scoped, tag = 'scoped memory for self_attention_forward.1']
    #allocation6 [shape = 'u8[16384]{0}', space=vmem, size = 0x4000, scoped, tag = 'input window, operand 5, single buffered']
    #allocation7 [shape = 'u8[512]{0}', space=vmem, size = 0x400, scoped, tag = 'input window, operand 6, single buffered']
    #allocation8 [shape = 's32[1]{0}', space=sflag, size = 0x4, scoped, tag = 'scoped memory for self_attention_forward.1']
    #allocation9 [shape = 'u8[65536]{0}', space=vmem, size = 0x10000, scoped, tag = 'input window, operand 7, single buffered']
    %14 = vsyncpa [#allocation3], 0
    %15 = vsyncpa [#allocation5], 0
    %16 = vsyncpa [#allocation8], 0
    // Predicated region
    $region2: #{self_attention_forward.1} parent=1 // pred_check
      _
    $region3: #{self_attention_forward.1} parent=1 // pred_check_branch
      %18 = sbr.rel (0) target = $region5
    $region4: #{self_attention_forward.1} parent=1 // pred_region
      _
    $region5: #{self_attention_forward.1} parent=1 // pred_fallthru
      _
    // Predicated region
    $region6: #{self_attention_forward.1} parent=1 // pred_check
      _
    $region7: #{self_attention_forward.1} parent=1 // pred_check_branch
      %20 = sbr.rel (0) target = $region9
    $region8: #{self_attention_forward.1} parent=1 // pred_region
      _
    $region9: #{self_attention_forward.1} parent=1 // pred_fallthru
      _
    // Predicated region
    $region10: #{self_attention_forward.1} parent=1 // pred_check
      _
    $region11: #{self_attention_forward.1} parent=1 // pred_check_branch
      %22 = sbr.rel (0) target = $region13
    $region12: #{self_attention_forward.1} parent=1 // pred_region
      %s24 = ssub.s32 32, 32
      %25 = vsyncadd [#allocation3], %s24
      %s27 = sshll.u32 [#allocation2], 4
      %s28 = int_to_ptr.vmem [resolvable:$true] %s27
      %30 = dma.hbm_to_vmem [thread:$0]  %s2, 32, %s28, [#allocation3]
    $region13: #{self_attention_forward.1} parent=1 // pred_fallthru
      _
    // Predicated region
    $region14: #{self_attention_forward.1} parent=1 // pred_check
      _
    $region15: #{self_attention_forward.1} parent=1 // pred_check_branch
      %32 = sbr.rel (0) target = $region17
    $region16: #{self_attention_forward.1} parent=1 // pred_region
      _
    $region17: #{self_attention_forward.1} parent=1 // pred_fallthru
      _
    // Predicated region
    $region18: #{self_attention_forward.1} parent=1 // pred_check
      _
    $region19: #{self_attention_forward.1} parent=1 // pred_check_branch
      %34 = sbr.rel (0) target = $region21
    $region20: #{self_attention_forward.1} parent=1 // pred_region
      %s36 = ssub.s32 32, 32
      %37 = vsyncadd [#allocation5], %s36
      %s39 = sshll.u32 [#allocation4], 4
      %s40 = int_to_ptr.vmem [resolvable:$true] %s39
      %42 = dma.hbm_to_vmem [thread:$0]  %s4, 32, %s40, [#allocation5]
    $region21: #{self_attention_forward.1} parent=1 // pred_fallthru
      _
    // Predicated region
    $region22: #{self_attention_forward.1} parent=1 // pred_check
      _
    $region23: #{self_attention_forward.1} parent=1 // pred_check_branch
      %44 = sbr.rel (0) target = $region25
    $region24: #{self_attention_forward.1} parent=1 // pred_region
      %s46 = ssub.s32 512, 512
      %47 = vsyncadd [#allocation5], %s46
      %s48 = sshll.u32 [#allocation6], 4
      %s49 = int_to_ptr.vmem [resolvable:$true] %s48
      %54 = dma.hbm_to_vmem [thread:$0]  %s5, 512, %s49, [#allocation5], 128, 128, 8
    $region25: #{self_attention_forward.1} parent=1 // pred_fallthru
      _
    // Predicated region
    $region26: #{self_attention_forward.1} parent=1 // pred_check
      _
    $region27: #{self_attention_forward.1} parent=1 // pred_check_branch
      %56 = sbr.rel (0) target = $region29
    $region28: #{self_attention_forward.1} parent=1 // pred_region
      %s58 = ssub.s32 16, 16
      %59 = vsyncadd [#allocation8], %s58
      %s61 = sshll.u32 [#allocation7], 4
      %s62 = int_to_ptr.vmem [resolvable:$true] %s61
      %64 = dma.hbm_to_vmem [thread:$0]  %s6, 16, %s62, [#allocation8]
    $region29: #{self_attention_forward.1} parent=1 // pred_fallthru
      _
    // Predicated region
    $region30: #{self_attention_forward.1} parent=1 // pred_check
      _
    $region31: #{self_attention_forward.1} parent=1 // pred_check_branch
      %66 = sbr.rel (0) target = $region33
    $region32: #{self_attention_forward.1} parent=1 // pred_region
      %s68 = ssub.s32 2048, 2048
      %69 = vsyncadd [#allocation8], %s68
      %s70 = sshll.u32 [#allocation9], 4
      %s71 = int_to_ptr.vmem [resolvable:$true] %s70
      %76 = dma.hbm_to_vmem [thread:$0]  %s7, 2048, %s71, [#allocation8], 256, 256, 16
    $region33: #{self_attention_forward.1} parent=1 // pred_fallthru
      _
    // Predicated region
    $region34: #{self_attention_forward.1} parent=1 // pred_check
      _
    $region35: #{self_attention_forward.1} parent=1 // pred_check_branch
      %78 = sbr.rel (0) target = $region37
    $region36: #{self_attention_forward.1} parent=1 // pred_region
      _
    $region37: #{self_attention_forward.1} parent=1 // pred_fallthru
      _
    // Predicated region
    $region38: #{self_attention_forward.1} parent=1 // pred_check
      _
    $region39: #{self_attention_forward.1} parent=1 // pred_check_branch
      %80 = sbr.rel (0) target = $region41
    $region40: #{self_attention_forward.1} parent=1 // pred_region
      %81 = dma.done [#allocation3], 32
    $region41: #{self_attention_forward.1} parent=1 // pred_fallthru
      _
    // Predicated region
    $region42: #{self_attention_forward.1} parent=1 // pred_check
      _
    $region43: #{self_attention_forward.1} parent=1 // pred_check_branch
      %83 = sbr.rel (0) target = $region45
    $region44: #{self_attention_forward.1} parent=1 // pred_region
      %84 = dma.done [#allocation5], 32
    $region45: #{self_attention_forward.1} parent=1 // pred_fallthru
      _
    // Predicated region
    $region46: #{self_attention_forward.1} parent=1 // pred_check
      _
    $region47: #{self_attention_forward.1} parent=1 // pred_check_branch
      %86 = sbr.rel (0) target = $region49
    $region48: #{self_attention_forward.1} parent=1 // pred_region
      %87 = dma.done [#allocation5], 512
    $region49: #{self_attention_forward.1} parent=1 // pred_fallthru
      _
    // Predicated region
    $region50: #{self_attention_forward.1} parent=1 // pred_check
      _
    $region51: #{self_attention_forward.1} parent=1 // pred_check_branch
      %89 = sbr.rel (0) target = $region53
    $region52: #{self_attention_forward.1} parent=1 // pred_region
      %90 = dma.done [#allocation8], 16
    $region53: #{self_attention_forward.1} parent=1 // pred_fallthru
      _
    // Predicated region
    $region54: #{self_attention_forward.1} parent=1 // pred_check
      _
    $region55: #{self_attention_forward.1} parent=1 // pred_check_branch
      %92 = sbr.rel (0) target = $region57
    $region56: #{self_attention_forward.1} parent=1 // pred_region
      %93 = dma.done [#allocation8], 2048
    $region57: #{self_attention_forward.1} parent=1 // pred_fallthru
      _
    %v94 = vld [vmem:[%s0] sm:$0xff]
    %v95 = vld [vmem:[%s0 + $0x8] sm:$0xff]
    %v96 = vld [vmem:[%s1] sm:$0xff]
    %v97 = vld [vmem:[%s1 + $0x8] sm:$0xff]
    %v98 = vld [vmem:[%s1 + $0x10] sm:$0xff]
    %v99 = vld [vmem:[%s1 + $0x18] sm:$0xff]
    %v100 = vld [vmem:[%s1 + $0x20] sm:$0xff]
    %v101 = vld [vmem:[%s1 + $0x28] sm:$0xff]
    %v102 = vld [vmem:[%s1 + $0x30] sm:$0xff]
    %v103 = vld [vmem:[%s1 + $0x38] sm:$0xff]
    %v104 = vld [vmem:[#allocation2] sm:$0x3]
    %v106 = vlaneseq
    %v107 = vshrl.u32 %v106, 7
    %v108 = vsub.s32 0, %v107
    %v109 = vrot.slane %v104, %v108
    %v110 = vlaneseq
    %v111 = vshrl.u32 %v110, 7
    %v112 = vsub.s32 1, %v111
    %v113 = vrot.slane %v104, %v112
    %vm116 = vcmask 261120
    %v118 = vsel %vm116, %v94, 0
    %v121 = vsel %vm116, %v95, 0
    %123 = vmatprep.subr.mxu0 0.0
    %124 = vmatpush1.msra.mxu0 0.0
    %125 = vmatprep.subr.mxu0 0.0
    %126 = vmatpush1.msra.mxu0 0.0
    %127 = vmatprep.subr.mxu0 0.0
    %128 = vmatpush1.msra.mxu0 0.0
    %129 = vmatprep.subr.mxu0 0.0
    %130 = vmatpush1.msra.mxu0 0.0
    %131 = vmatprep.subr.mxu0 0.0
    %132 = vmatpush1.msra.mxu0 0.0
    %133 = vmatprep.subr.mxu0 0.0
    %134 = vmatpush1.msra.mxu0 0.0
    %135 = vmatprep.subr.mxu0 0.0
    %136 = vmatpush1.msra.mxu0 0.0
    %137 = vmatprep.subr.mxu0 0.0
    %138 = vmatpush1.msra.mxu0 0.0
    %139 = vmatprep.subr.mxu0 0.0
    %140 = vmatpush1.msra.mxu0 0.0
    %141 = vmatprep.subr.mxu0 0.0
    %142 = vmatpush1.msra.mxu0 0.0
    %143 = vmatprep.subr.mxu0 0.0
    %144 = vmatpush1.msra.mxu0 0.0
    %145 = vmatprep.subr.mxu0 0.0
    %146 = vmatpush1.msra.mxu0 0.0
    %147 = vmatprep.subr.mxu0 %v103
    %148 = vmatpush1.msra.mxu0 %v102
    %149 = vmatprep.subr.mxu0 %v101
    %150 = vmatpush1.msra.mxu0 %v100
    %151 = vmatprep.subr.mxu0 %v99
    %152 = vmatpush1.msra.mxu0 %v98
    %153 = vmatprep.subr.mxu0 %v97
    %154 = vmatpush1.msra.mxu0 %v96
    %155 = vmatprep.subr.mxu0 0.0
    %156 = vmatpush2.msra.mxu0 0.0
    %157 = vmatprep.subr.mxu0 0.0
    %158 = vmatpush2.msra.mxu0 0.0
    %159 = vmatprep.subr.mxu0 0.0
    %160 = vmatpush2.msra.mxu0 0.0
    %161 = vmatprep.subr.mxu0 0.0
    %162 = vmatpush2.msra.mxu0 0.0
    %163 = vmatprep.subr.mxu0 0.0
    %164 = vmatpush2.msra.mxu0 0.0
    %165 = vmatprep.subr.mxu0 0.0
    %166 = vmatpush2.msra.mxu0 0.0
    %167 = vmatprep.subr.mxu0 0.0
    %168 = vmatpush2.msra.mxu0 0.0
    %169 = vmatprep.subr.mxu0 0.0
    %170 = vmatpush2.msra.mxu0 0.0
    %171 = vmatprep.subr.mxu0 0.0
    %172 = vmatpush2.msra.mxu0 0.0
    %173 = vmatprep.subr.mxu0 0.0
    %174 = vmatpush2.msra.mxu0 0.0
    %175 = vmatprep.subr.mxu0 0.0
    %176 = vmatpush2.msra.mxu0 0.0
    %177 = vmatprep.subr.mxu0 0.0
    %178 = vmatpush2.msra.mxu0 0.0
    %179 = vmatprep.subr.mxu0 0.0
    %180 = vmatpush2.msra.mxu0 0.0
    %181 = vmatprep.subr.mxu0 0.0
    %182 = vmatpush2.msra.mxu0 0.0
    %183 = vmatprep.subr.mxu0 0.0
    %184 = vmatpush2.msra.mxu0 0.0
    %185 = vmatprep.subr.mxu0 0.0
    %186 = vmatpush2.msra.mxu0 0.0
    %187 = vmatprep.mubr.f32.mxu0 0.0
    %188 = vmatmul.mubr.f32.gmra.mxu0 %v118
    %v189 = vpop.f32.mrf.mxu0
    %v190 = vadd.f32 %v109, %v189
    %v191 = vpop.f32.mrf.mxu0
    %v192 = vadd.f32 %v113, %v191
    %193 = vmatprep.mubr.f32.mxu0 0.0
    %194 = vmatmul.mubr.f32.gmra.mxu0 %v121
    %v195 = vpop.f32.mrf.mxu0
    %v196 = vadd.f32 %v109, %v195
    %v197 = vpop.f32.mrf.mxu0
    %v198 = vadd.f32 %v113, %v197
    %199 = vdwg.mxu0
    %v200 = vld [vmem:[%s3] sm:$0xff]
    %v201 = vld [vmem:[%s3 + $0x8] sm:$0xff]
    %v202 = vld [vmem:[%s3 + $0x10] sm:$0xff]
    %v203 = vld [vmem:[%s3 + $0x18] sm:$0xff]
    %v204 = vld [vmem:[%s3 + $0x20] sm:$0xff]
    %v205 = vld [vmem:[%s3 + $0x28] sm:$0xff]
    %v206 = vld [vmem:[%s3 + $0x30] sm:$0xff]
    %v207 = vld [vmem:[%s3 + $0x38] sm:$0xff]
    %v208 = vld [vmem:[#allocation4] sm:$0x3]
    %v210 = vlaneseq
    %v211 = vshrl.u32 %v210, 7
    %v212 = vsub.s32 0, %v211
    %v213 = vrot.slane %v208, %v212
    %v214 = vlaneseq
    %v215 = vshrl.u32 %v214, 7
    %v216 = vsub.s32 1, %v215
    %v217 = vrot.slane %v208, %v216
    %220 = vmatprep.subr.mxu0 0.0
    %221 = vmatpush1.msra.mxu0 0.0
    %222 = vmatprep.subr.mxu0 0.0
    %223 = vmatpush1.msra.mxu0 0.0
    %224 = vmatprep.subr.mxu0 0.0
    %225 = vmatpush1.msra.mxu0 0.0
    %226 = vmatprep.subr.mxu0 0.0
    %227 = vmatpush1.msra.mxu0 0.0
    %228 = vmatprep.subr.mxu0 0.0
    %229 = vmatpush1.msra.mxu0 0.0
    %230 = vmatprep.subr.mxu0 0.0
    %231 = vmatpush1.msra.mxu0 0.0
    %232 = vmatprep.subr.mxu0 0.0
    %233 = vmatpush1.msra.mxu0 0.0
    %234 = vmatprep.subr.mxu0 0.0
    %235 = vmatpush1.msra.mxu0 0.0
    %236 = vmatprep.subr.mxu0 0.0
    %237 = vmatpush1.msra.mxu0 0.0
    %238 = vmatprep.subr.mxu0 0.0
    %239 = vmatpush1.msra.mxu0 0.0
    %240 = vmatprep.subr.mxu0 0.0
    %241 = vmatpush1.msra.mxu0 0.0
    %242 = vmatprep.subr.mxu0 0.0
    %243 = vmatpush1.msra.mxu0 0.0
    %244 = vmatprep.subr.mxu0 %v207
    %245 = vmatpush1.msra.mxu0 %v206
    %246 = vmatprep.subr.mxu0 %v205
    %247 = vmatpush1.msra.mxu0 %v204
    %248 = vmatprep.subr.mxu0 %v203
    %249 = vmatpush1.msra.mxu0 %v202
    %250 = vmatprep.subr.mxu0 %v201
    %251 = vmatpush1.msra.mxu0 %v200
    %252 = vmatprep.subr.mxu0 0.0
    %253 = vmatpush2.msra.mxu0 0.0
    %254 = vmatprep.subr.mxu0 0.0
    %255 = vmatpush2.msra.mxu0 0.0
    %256 = vmatprep.subr.mxu0 0.0
    %257 = vmatpush2.msra.mxu0 0.0
    %258 = vmatprep.subr.mxu0 0.0
    %259 = vmatpush2.msra.mxu0 0.0
    %260 = vmatprep.subr.mxu0 0.0
    %261 = vmatpush2.msra.mxu0 0.0
    %262 = vmatprep.subr.mxu0 0.0
    %263 = vmatpush2.msra.mxu0 0.0
    %264 = vmatprep.subr.mxu0 0.0
    %265 = vmatpush2.msra.mxu0 0.0
    %266 = vmatprep.subr.mxu0 0.0
    %267 = vmatpush2.msra.mxu0 0.0
    %268 = vmatprep.subr.mxu0 0.0
    %269 = vmatpush2.msra.mxu0 0.0
    %270 = vmatprep.subr.mxu0 0.0
    %271 = vmatpush2.msra.mxu0 0.0
    %272 = vmatprep.subr.mxu0 0.0
    %273 = vmatpush2.msra.mxu0 0.0
    %274 = vmatprep.subr.mxu0 0.0
    %275 = vmatpush2.msra.mxu0 0.0
    %276 = vmatprep.subr.mxu0 0.0
    %277 = vmatpush2.msra.mxu0 0.0
    %278 = vmatprep.subr.mxu0 0.0
    %279 = vmatpush2.msra.mxu0 0.0
    %280 = vmatprep.subr.mxu0 0.0
    %281 = vmatpush2.msra.mxu0 0.0
    %282 = vmatprep.subr.mxu0 0.0
    %283 = vmatpush2.msra.mxu0 0.0
    %284 = vmatprep.mubr.f32.mxu0 0.0
    %285 = vmatmul.mubr.f32.gmra.mxu0 %v118
    %v286 = vpop.f32.mrf.mxu0
    %v287 = vadd.f32 %v213, %v286
    %v288 = vpop.f32.mrf.mxu0
    %v289 = vadd.f32 %v217, %v288
    %290 = vmatprep.mubr.f32.mxu0 0.0
    %291 = vmatmul.mubr.f32.gmra.mxu0 %v121
    %v292 = vpop.f32.mrf.mxu0
    %v293 = vadd.f32 %v213, %v292
    %v294 = vpop.f32.mrf.mxu0
    %v295 = vadd.f32 %v217, %v294
    %296 = vdwg.mxu0
    %v297 = vld [vmem:[#allocation6] sm:$0xff]
    %v298 = vld [vmem:[#allocation6 + $0x8] sm:$0xff]
    %v299 = vld [vmem:[#allocation6 + $0x10] sm:$0xff]
    %v300 = vld [vmem:[#allocation6 + $0x18] sm:$0xff]
    %v301 = vld [vmem:[#allocation7] sm:$0x1]
    %v303 = vlaneseq
    %v304 = vshrl.u32 %v303, 7
    %v305 = vsub.s32 0, %v304
    %v306 = vrot.slane %v301, %v305
    %308 = vmatprep.subr.mxu0 0.0
    %309 = vmatpush1.msra.mxu0 0.0
    %310 = vmatprep.subr.mxu0 0.0
    %311 = vmatpush1.msra.mxu0 0.0
    %312 = vmatprep.subr.mxu0 0.0
    %313 = vmatpush1.msra.mxu0 0.0
    %314 = vmatprep.subr.mxu0 0.0
    %315 = vmatpush1.msra.mxu0 0.0
    %316 = vmatprep.subr.mxu0 0.0
    %317 = vmatpush1.msra.mxu0 0.0
    %318 = vmatprep.subr.mxu0 0.0
    %319 = vmatpush1.msra.mxu0 0.0
    %320 = vmatprep.subr.mxu0 0.0
    %321 = vmatpush1.msra.mxu0 0.0
    %322 = vmatprep.subr.mxu0 0.0
    %323 = vmatpush1.msra.mxu0 0.0
    %324 = vmatprep.subr.mxu0 0.0
    %325 = vmatpush1.msra.mxu0 0.0
    %326 = vmatprep.subr.mxu0 0.0
    %327 = vmatpush1.msra.mxu0 0.0
    %328 = vmatprep.subr.mxu0 0.0
    %329 = vmatpush1.msra.mxu0 0.0
    %330 = vmatprep.subr.mxu0 0.0
    %331 = vmatpush1.msra.mxu0 0.0
    %332 = vmatprep.subr.mxu0 0.0
    %333 = vmatpush1.msra.mxu0 %v300
    %334 = vmatprep.subr.mxu0 0.0
    %335 = vmatpush1.msra.mxu0 %v299
    %336 = vmatprep.subr.mxu0 0.0
    %337 = vmatpush1.msra.mxu0 %v298
    %338 = vmatprep.subr.mxu0 0.0
    %339 = vmatpush1.msra.mxu0 %v297
    %340 = vmatprep.subr.mxu0 0.0
    %341 = vmatpush2.msra.mxu0 0.0
    %342 = vmatprep.subr.mxu0 0.0
    %343 = vmatpush2.msra.mxu0 0.0
    %344 = vmatprep.subr.mxu0 0.0
    %345 = vmatpush2.msra.mxu0 0.0
    %346 = vmatprep.subr.mxu0 0.0
    %347 = vmatpush2.msra.mxu0 0.0
    %348 = vmatprep.subr.mxu0 0.0
    %349 = vmatpush2.msra.mxu0 0.0
    %350 = vmatprep.subr.mxu0 0.0
    %351 = vmatpush2.msra.mxu0 0.0
    %352 = vmatprep.subr.mxu0 0.0
    %353 = vmatpush2.msra.mxu0 0.0
    %354 = vmatprep.subr.mxu0 0.0
    %355 = vmatpush2.msra.mxu0 0.0
    %356 = vmatprep.subr.mxu0 0.0
    %357 = vmatpush2.msra.mxu0 0.0
    %358 = vmatprep.subr.mxu0 0.0
    %359 = vmatpush2.msra.mxu0 0.0
    %360 = vmatprep.subr.mxu0 0.0
    %361 = vmatpush2.msra.mxu0 0.0
    %362 = vmatprep.subr.mxu0 0.0
    %363 = vmatpush2.msra.mxu0 0.0
    %364 = vmatprep.subr.mxu0 0.0
    %365 = vmatpush2.msra.mxu0 0.0
    %366 = vmatprep.subr.mxu0 0.0
    %367 = vmatpush2.msra.mxu0 0.0
    %368 = vmatprep.subr.mxu0 0.0
    %369 = vmatpush2.msra.mxu0 0.0
    %370 = vmatprep.subr.mxu0 0.0
    %371 = vmatpush2.msra.mxu0 0.0
    %372 = vmatprep.mubr.f32.mxu0 0.0
    %373 = vmatmul.mubr.f32.gmra.mxu0 %v118
    %v374 = vpop.f32.mrf.mxu0
    %v375 = vadd.f32 %v306, %v374
    %v376 = vpop.f32.mrf.mxu0
    %377 = vmatprep.mubr.f32.mxu0 0.0
    %378 = vmatmul.mubr.f32.gmra.mxu0 %v121
    %v379 = vpop.f32.mrf.mxu0
    %v380 = vadd.f32 %v306, %v379
    %v381 = vpop.f32.mrf.mxu0
    %382 = vdwg.mxu0
    %v383 = vld [vmem:[#allocation9] sm:$0xff]
    %v384 = vld [vmem:[#allocation9 + $0x8] sm:$0xff]
    %v385 = vld [vmem:[#allocation9 + $0x10] sm:$0xff]
    %v386 = vld [vmem:[#allocation9 + $0x18] sm:$0xff]
    %v387 = vld [vmem:[#allocation9 + $0x20] sm:$0xff]
    %v388 = vld [vmem:[#allocation9 + $0x28] sm:$0xff]
    %v389 = vld [vmem:[#allocation9 + $0x30] sm:$0xff]
    %v390 = vld [vmem:[#allocation9 + $0x38] sm:$0xff]
    %v391 = vld [vmem:[#allocation9 + $0x40] sm:$0xff]
    %v392 = vld [vmem:[#allocation9 + $0x48] sm:$0xff]
    %v393 = vld [vmem:[#allocation9 + $0x50] sm:$0xff]
    %v394 = vld [vmem:[#allocation9 + $0x58] sm:$0xff]
    %v395 = vld [vmem:[#allocation9 + $0x60] sm:$0xff]
    %v396 = vld [vmem:[#allocation9 + $0x68] sm:$0xff]
    %v397 = vld [vmem:[#allocation9 + $0x70] sm:$0xff]
    %v398 = vld [vmem:[#allocation9 + $0x78] sm:$0xff]
    %v399 = vld [vmem:[%s8] sm:$0xff]
    %v400 = vld [vmem:[%s8 + $0x8] sm:$0xff]
    %v401 = vld [vmem:[%s8 + $0x10] sm:$0xff]
    %v402 = vld [vmem:[%s8 + $0x18] sm:$0xff]
    %v403 = vld [vmem:[%s8 + $0x20] sm:$0xff]
    %v404 = vld [vmem:[%s8 + $0x28] sm:$0xff]
    %v405 = vld [vmem:[%s8 + $0x30] sm:$0xff]
    %v406 = vld [vmem:[%s8 + $0x38] sm:$0xff]
    %v407 = vmul.f32 %v287, %v383
    %v408 = vmul.f32 %v289, %v384
    %v409 = vmul.f32 %v287, %v385
    %v410 = vmul.f32 %v289, %v386
    %v411 = vmul.f32 %v287, %v387
    %v412 = vmul.f32 %v289, %v388
    %v413 = vmul.f32 %v287, %v389
    %v414 = vmul.f32 %v289, %v390
    %v415 = vmul.f32 %v287, %v391
    %v416 = vmul.f32 %v289, %v392
    %v417 = vmul.f32 %v287, %v393
    %v418 = vmul.f32 %v289, %v394
    %v419 = vmul.f32 %v287, %v395
    %v420 = vmul.f32 %v289, %v396
    %v421 = vmul.f32 %v287, %v397
    %v422 = vmul.f32 %v289, %v398
    %v423 = vmul.f32 %v375, %v399
    %v424 = vmul.f32 %v375, %v400
    %v425 = vmul.f32 %v375, %v401
    %v426 = vmul.f32 %v375, %v402
    %v427 = vmul.f32 %v375, %v403
    %v428 = vmul.f32 %v375, %v404
    %v429 = vmul.f32 %v375, %v405
    %v430 = vmul.f32 %v375, %v406
    %431 = vmatprep.subr.mxu0 0.0
    %432 = vmatpush1.xpose.msra.mxu0 0.0
    %433 = vmatprep.subr.mxu0 0.0
    %434 = vmatpush1.xpose.msra.mxu0 0.0
    %435 = vmatprep.subr.mxu0 0.0
    %436 = vmatpush1.xpose.msra.mxu0 0.0
    %437 = vmatprep.subr.mxu0 0.0
    %438 = vmatpush1.xpose.msra.mxu0 0.0
    %439 = vmatprep.subr.mxu0 0.0
    %440 = vmatpush1.xpose.msra.mxu0 0.0
    %441 = vmatprep.subr.mxu0 0.0
    %442 = vmatpush1.xpose.msra.mxu0 0.0
    %443 = vmatprep.subr.mxu0 0.0
    %444 = vmatpush1.xpose.msra.mxu0 0.0
    %445 = vmatprep.subr.mxu0 0.0
    %446 = vmatpush1.xpose.msra.mxu0 0.0
    %447 = vmatprep.subr.mxu0 %v422
    %448 = vmatpush1.xpose.msra.mxu0 %v421
    %449 = vmatprep.subr.mxu0 %v420
    %450 = vmatpush1.xpose.msra.mxu0 %v419
    %451 = vmatprep.subr.mxu0 %v418
    %452 = vmatpush1.xpose.msra.mxu0 %v417
    %453 = vmatprep.subr.mxu0 %v416
    %454 = vmatpush1.xpose.msra.mxu0 %v415
    %455 = vmatprep.subr.mxu0 %v414
    %456 = vmatpush1.xpose.msra.mxu0 %v413
    %457 = vmatprep.subr.mxu0 %v412
    %458 = vmatpush1.xpose.msra.mxu0 %v411
    %459 = vmatprep.subr.mxu0 %v410
    %460 = vmatpush1.xpose.msra.mxu0 %v409
    %461 = vmatprep.subr.mxu0 %v408
    %462 = vmatpush1.xpose.msra.mxu0 %v407
    %463 = vmatprep.subr.mxu0 0.0
    %464 = vmatpush2.xpose.msra.mxu0 0.0
    %465 = vmatprep.subr.mxu0 0.0
    %466 = vmatpush2.xpose.msra.mxu0 0.0
    %467 = vmatprep.subr.mxu0 0.0
    %468 = vmatpush2.xpose.msra.mxu0 0.0
    %469 = vmatprep.subr.mxu0 0.0
    %470 = vmatpush2.xpose.msra.mxu0 0.0
    %471 = vmatprep.subr.mxu0 0.0
    %472 = vmatpush2.xpose.msra.mxu0 0.0
    %473 = vmatprep.subr.mxu0 0.0
    %474 = vmatpush2.xpose.msra.mxu0 0.0
    %475 = vmatprep.subr.mxu0 0.0
    %476 = vmatpush2.xpose.msra.mxu0 0.0
    %477 = vmatprep.subr.mxu0 0.0
    %478 = vmatpush2.xpose.msra.mxu0 0.0
    %479 = vmatprep.subr.mxu0 0.0
    %480 = vmatpush2.xpose.msra.mxu0 0.0
    %481 = vmatprep.subr.mxu0 0.0
    %482 = vmatpush2.xpose.msra.mxu0 0.0
    %483 = vmatprep.subr.mxu0 0.0
    %484 = vmatpush2.xpose.msra.mxu0 0.0
    %485 = vmatprep.subr.mxu0 0.0
    %486 = vmatpush2.xpose.msra.mxu0 0.0
    %487 = vmatprep.subr.mxu0 0.0
    %488 = vmatpush2.xpose.msra.mxu0 0.0
    %489 = vmatprep.subr.mxu0 0.0
    %490 = vmatpush2.xpose.msra.mxu0 0.0
    %491 = vmatprep.subr.mxu0 0.0
    %492 = vmatpush2.xpose.msra.mxu0 0.0
    %493 = vmatprep.subr.mxu0 0.0
    %494 = vmatpush2.xpose.msra.mxu0 0.0
    %495 = vmatprep.mubr.f32.mxu0 %v192
    %496 = vmatmul.mubr.f32.gmra.mxu0 %v190
    %v497 = vpop.f32.mrf.mxu0
    %v498 = vadd.f32 0.0, %v497
    %v499 = vpop.f32.mrf.mxu0
    %500 = vdwg.mxu0
    %vm501 = vcmp.ge.f32.partialorder %v498, 0.0
    %v502 = vmul.f32 %v498, 0.1
    %v503 = vsel %vm501, %v498, %v502
    %vm504 = vcmask 523264
    %v505 = vsel %vm504, %v503, -inf
    %v506 = vrot.slane %v505, 4
    %v507 = vmax.f32 %v505, %v506
    %v508 = vrot.slane %v507, 2
    %v509 = vmax.f32 %v507, %v508
    %v510 = vrot.slane %v509, 1
    %v511 = vmax.f32 %v509, %v510
    %v512 = vsub.f32 %v503, %v511
    %v513 = vmul.f32 %v512, 1.442695
    %v514 = vpow.pop %v513
    %v515 = vsel %vm504, %v514, 0.0
    %v516 = vrot.slane %v515, 4
    %v517 = vadd.f32 %v515, %v516
    %v518 = vrot.slane %v517, 2
    %v519 = vadd.f32 %v517, %v518
    %v520 = vrot.slane %v519, 1
    %v521 = vadd.f32 %v519, %v520
    %v522 = vrcp.pop %v521
    %v523 = vmul.f32 %v514, %v522
    %v525 = vsel %vm504, %v523, 0
    %527 = vmatprep.subr.mxu0 0.0
    %528 = vmatpush1.msra.mxu0 0.0
    %529 = vmatprep.subr.mxu0 0.0
    %530 = vmatpush1.msra.mxu0 0.0
    %531 = vmatprep.subr.mxu0 0.0
    %532 = vmatpush1.msra.mxu0 0.0
    %533 = vmatprep.subr.mxu0 0.0
    %534 = vmatpush1.msra.mxu0 0.0
    %535 = vmatprep.subr.mxu0 0.0
    %536 = vmatpush1.msra.mxu0 0.0
    %537 = vmatprep.subr.mxu0 0.0
    %538 = vmatpush1.msra.mxu0 0.0
    %539 = vmatprep.subr.mxu0 0.0
    %540 = vmatpush1.msra.mxu0 0.0
    %541 = vmatprep.subr.mxu0 0.0
    %542 = vmatpush1.msra.mxu0 0.0
    %543 = vmatprep.subr.mxu0 0.0
    %544 = vmatpush1.msra.mxu0 %v430
    %545 = vmatprep.subr.mxu0 0.0
    %546 = vmatpush1.msra.mxu0 %v429
    %547 = vmatprep.subr.mxu0 0.0
    %548 = vmatpush1.msra.mxu0 %v428
    %549 = vmatprep.subr.mxu0 0.0
    %550 = vmatpush1.msra.mxu0 %v427
    %551 = vmatprep.subr.mxu0 0.0
    %552 = vmatpush1.msra.mxu0 %v426
    %553 = vmatprep.subr.mxu0 0.0
    %554 = vmatpush1.msra.mxu0 %v425
    %555 = vmatprep.subr.mxu0 0.0
    %556 = vmatpush1.msra.mxu0 %v424
    %557 = vmatprep.subr.mxu0 0.0
    %558 = vmatpush1.msra.mxu0 %v423
    %559 = vmatprep.subr.mxu0 0.0
    %560 = vmatpush2.msra.mxu0 0.0
    %561 = vmatprep.subr.mxu0 0.0
    %562 = vmatpush2.msra.mxu0 0.0
    %563 = vmatprep.subr.mxu0 0.0
    %564 = vmatpush2.msra.mxu0 0.0
    %565 = vmatprep.subr.mxu0 0.0
    %566 = vmatpush2.msra.mxu0 0.0
    %567 = vmatprep.subr.mxu0 0.0
    %568 = vmatpush2.msra.mxu0 0.0
    %569 = vmatprep.subr.mxu0 0.0
    %570 = vmatpush2.msra.mxu0 0.0
    %571 = vmatprep.subr.mxu0 0.0
    %572 = vmatpush2.msra.mxu0 0.0
    %573 = vmatprep.subr.mxu0 0.0
    %574 = vmatpush2.msra.mxu0 0.0
    %575 = vmatprep.subr.mxu0 0.0
    %576 = vmatpush2.msra.mxu0 0.0
    %577 = vmatprep.subr.mxu0 0.0
    %578 = vmatpush2.msra.mxu0 0.0
    %579 = vmatprep.subr.mxu0 0.0
    %580 = vmatpush2.msra.mxu0 0.0
    %581 = vmatprep.subr.mxu0 0.0
    %582 = vmatpush2.msra.mxu0 0.0
    %583 = vmatprep.subr.mxu0 0.0
    %584 = vmatpush2.msra.mxu0 0.0
    %585 = vmatprep.subr.mxu0 0.0
    %586 = vmatpush2.msra.mxu0 0.0
    %587 = vmatprep.subr.mxu0 0.0
    %588 = vmatpush2.msra.mxu0 0.0
    %589 = vmatprep.subr.mxu0 0.0
    %590 = vmatpush2.msra.mxu0 0.0
    %591 = vmatprep.mubr.f32.mxu0 0.0
    %592 = vmatmul.mubr.f32.gmra.mxu0 %v525
    %v593 = vpop.f32.mrf.mxu0
    %v594 = vadd.f32 0.0, %v593
    %v595 = vpop.f32.mrf.mxu0
    %596 = vdwg.mxu0
    %v597 = vmul.f32 %v293, %v383
    %v598 = vmul.f32 %v295, %v384
    %v599 = vmul.f32 %v293, %v385
    %v600 = vmul.f32 %v295, %v386
    %v601 = vmul.f32 %v293, %v387
    %v602 = vmul.f32 %v295, %v388
    %v603 = vmul.f32 %v293, %v389
    %v604 = vmul.f32 %v295, %v390
    %v605 = vmul.f32 %v293, %v391
    %v606 = vmul.f32 %v295, %v392
    %v607 = vmul.f32 %v293, %v393
    %v608 = vmul.f32 %v295, %v394
    %v609 = vmul.f32 %v293, %v395
    %v610 = vmul.f32 %v295, %v396
    %v611 = vmul.f32 %v293, %v397
    %v612 = vmul.f32 %v295, %v398
    %v613 = vmul.f32 %v380, %v399
    %v614 = vmul.f32 %v380, %v400
    %v615 = vmul.f32 %v380, %v401
    %v616 = vmul.f32 %v380, %v402
    %v617 = vmul.f32 %v380, %v403
    %v618 = vmul.f32 %v380, %v404
    %v619 = vmul.f32 %v380, %v405
    %v620 = vmul.f32 %v380, %v406
    %621 = vmatprep.subr.mxu0 0.0
    %622 = vmatpush1.xpose.msra.mxu0 0.0
    %623 = vmatprep.subr.mxu0 0.0
    %624 = vmatpush1.xpose.msra.mxu0 0.0
    %625 = vmatprep.subr.mxu0 0.0
    %626 = vmatpush1.xpose.msra.mxu0 0.0
    %627 = vmatprep.subr.mxu0 0.0
    %628 = vmatpush1.xpose.msra.mxu0 0.0
    %629 = vmatprep.subr.mxu0 0.0
    %630 = vmatpush1.xpose.msra.mxu0 0.0
    %631 = vmatprep.subr.mxu0 0.0
    %632 = vmatpush1.xpose.msra.mxu0 0.0
    %633 = vmatprep.subr.mxu0 0.0
    %634 = vmatpush1.xpose.msra.mxu0 0.0
    %635 = vmatprep.subr.mxu0 0.0
    %636 = vmatpush1.xpose.msra.mxu0 0.0
    %637 = vmatprep.subr.mxu0 %v612
    %638 = vmatpush1.xpose.msra.mxu0 %v611
    %639 = vmatprep.subr.mxu0 %v610
    %640 = vmatpush1.xpose.msra.mxu0 %v609
    %641 = vmatprep.subr.mxu0 %v608
    %642 = vmatpush1.xpose.msra.mxu0 %v607
    %643 = vmatprep.subr.mxu0 %v606
    %644 = vmatpush1.xpose.msra.mxu0 %v605
    %645 = vmatprep.subr.mxu0 %v604
    %646 = vmatpush1.xpose.msra.mxu0 %v603
    %647 = vmatprep.subr.mxu0 %v602
    %648 = vmatpush1.xpose.msra.mxu0 %v601
    %649 = vmatprep.subr.mxu0 %v600
    %650 = vmatpush1.xpose.msra.mxu0 %v599
    %651 = vmatprep.subr.mxu0 %v598
    %652 = vmatpush1.xpose.msra.mxu0 %v597
    %653 = vmatprep.subr.mxu0 0.0
    %654 = vmatpush2.xpose.msra.mxu0 0.0
    %655 = vmatprep.subr.mxu0 0.0
    %656 = vmatpush2.xpose.msra.mxu0 0.0
    %657 = vmatprep.subr.mxu0 0.0
    %658 = vmatpush2.xpose.msra.mxu0 0.0
    %659 = vmatprep.subr.mxu0 0.0
    %660 = vmatpush2.xpose.msra.mxu0 0.0
    %661 = vmatprep.subr.mxu0 0.0
    %662 = vmatpush2.xpose.msra.mxu0 0.0
    %663 = vmatprep.subr.mxu0 0.0
    %664 = vmatpush2.xpose.msra.mxu0 0.0
    %665 = vmatprep.subr.mxu0 0.0
    %666 = vmatpush2.xpose.msra.mxu0 0.0
    %667 = vmatprep.subr.mxu0 0.0
    %668 = vmatpush2.xpose.msra.mxu0 0.0
    %669 = vmatprep.subr.mxu0 0.0
    %670 = vmatpush2.xpose.msra.mxu0 0.0
    %671 = vmatprep.subr.mxu0 0.0
    %672 = vmatpush2.xpose.msra.mxu0 0.0
    %673 = vmatprep.subr.mxu0 0.0
    %674 = vmatpush2.xpose.msra.mxu0 0.0
    %675 = vmatprep.subr.mxu0 0.0
    %676 = vmatpush2.xpose.msra.mxu0 0.0
    %677 = vmatprep.subr.mxu0 0.0
    %678 = vmatpush2.xpose.msra.mxu0 0.0
    %679 = vmatprep.subr.mxu0 0.0
    %680 = vmatpush2.xpose.msra.mxu0 0.0
    %681 = vmatprep.subr.mxu0 0.0
    %682 = vmatpush2.xpose.msra.mxu0 0.0
    %683 = vmatprep.subr.mxu0 0.0
    %684 = vmatpush2.xpose.msra.mxu0 0.0
    %685 = vmatprep.mubr.f32.mxu0 %v198
    %686 = vmatmul.mubr.f32.gmra.mxu0 %v196
    %v687 = vpop.f32.mrf.mxu0
    %v688 = vadd.f32 0.0, %v687
    %v689 = vpop.f32.mrf.mxu0
    %690 = vdwg.mxu0
    %vm691 = vcmp.ge.f32.partialorder %v688, 0.0
    %v692 = vmul.f32 %v688, 0.1
    %v693 = vsel %vm691, %v688, %v692
    %v694 = vsel %vm504, %v693, -inf
    %v695 = vrot.slane %v694, 4
    %v696 = vmax.f32 %v694, %v695
    %v697 = vrot.slane %v696, 2
    %v698 = vmax.f32 %v696, %v697
    %v699 = vrot.slane %v698, 1
    %v700 = vmax.f32 %v698, %v699
    %v701 = vsub.f32 %v693, %v700
    %v702 = vmul.f32 %v701, 1.442695
    %v703 = vpow.pop %v702
    %v704 = vsel %vm504, %v703, 0.0
    %v705 = vrot.slane %v704, 4
    %v706 = vadd.f32 %v704, %v705
    %v707 = vrot.slane %v706, 2
    %v708 = vadd.f32 %v706, %v707
    %v709 = vrot.slane %v708, 1
    %v710 = vadd.f32 %v708, %v709
    %v711 = vrcp.pop %v710
    %v712 = vmul.f32 %v703, %v711
    %v714 = vsel %vm504, %v712, 0
    %716 = vmatprep.subr.mxu0 0.0
    %717 = vmatpush1.msra.mxu0 0.0
    %718 = vmatprep.subr.mxu0 0.0
    %719 = vmatpush1.msra.mxu0 0.0
    %720 = vmatprep.subr.mxu0 0.0
    %721 = vmatpush1.msra.mxu0 0.0
    %722 = vmatprep.subr.mxu0 0.0
    %723 = vmatpush1.msra.mxu0 0.0
    %724 = vmatprep.subr.mxu0 0.0
    %725 = vmatpush1.msra.mxu0 0.0
    %726 = vmatprep.subr.mxu0 0.0
    %727 = vmatpush1.msra.mxu0 0.0
    %728 = vmatprep.subr.mxu0 0.0
    %729 = vmatpush1.msra.mxu0 0.0
    %730 = vmatprep.subr.mxu0 0.0
    %731 = vmatpush1.msra.mxu0 0.0
    %732 = vmatprep.subr.mxu0 0.0
    %733 = vmatpush1.msra.mxu0 %v620
    %734 = vmatprep.subr.mxu0 0.0
    %735 = vmatpush1.msra.mxu0 %v619
    %736 = vmatprep.subr.mxu0 0.0
    %737 = vmatpush1.msra.mxu0 %v618
    %738 = vmatprep.subr.mxu0 0.0
    %739 = vmatpush1.msra.mxu0 %v617
    %740 = vmatprep.subr.mxu0 0.0
    %741 = vmatpush1.msra.mxu0 %v616
    %742 = vmatprep.subr.mxu0 0.0
    %743 = vmatpush1.msra.mxu0 %v615
    %744 = vmatprep.subr.mxu0 0.0
    %745 = vmatpush1.msra.mxu0 %v614
    %746 = vmatprep.subr.mxu0 0.0
    %747 = vmatpush1.msra.mxu0 %v613
    %748 = vmatprep.subr.mxu0 0.0
    %749 = vmatpush2.msra.mxu0 0.0
    %750 = vmatprep.subr.mxu0 0.0
    %751 = vmatpush2.msra.mxu0 0.0
    %752 = vmatprep.subr.mxu0 0.0
    %753 = vmatpush2.msra.mxu0 0.0
    %754 = vmatprep.subr.mxu0 0.0
    %755 = vmatpush2.msra.mxu0 0.0
    %756 = vmatprep.subr.mxu0 0.0
    %757 = vmatpush2.msra.mxu0 0.0
    %758 = vmatprep.subr.mxu0 0.0
    %759 = vmatpush2.msra.mxu0 0.0
    %760 = vmatprep.subr.mxu0 0.0
    %761 = vmatpush2.msra.mxu0 0.0
    %762 = vmatprep.subr.mxu0 0.0
    %763 = vmatpush2.msra.mxu0 0.0
    %764 = vmatprep.subr.mxu0 0.0
    %765 = vmatpush2.msra.mxu0 0.0
    %766 = vmatprep.subr.mxu0 0.0
    %767 = vmatpush2.msra.mxu0 0.0
    %768 = vmatprep.subr.mxu0 0.0
    %769 = vmatpush2.msra.mxu0 0.0
    %770 = vmatprep.subr.mxu0 0.0
    %771 = vmatpush2.msra.mxu0 0.0
    %772 = vmatprep.subr.mxu0 0.0
    %773 = vmatpush2.msra.mxu0 0.0
    %774 = vmatprep.subr.mxu0 0.0
    %775 = vmatpush2.msra.mxu0 0.0
    %776 = vmatprep.subr.mxu0 0.0
    %777 = vmatpush2.msra.mxu0 0.0
    %778 = vmatprep.subr.mxu0 0.0
    %779 = vmatpush2.msra.mxu0 0.0
    %780 = vmatprep.mubr.f32.mxu0 0.0
    %781 = vmatmul.mubr.f32.gmra.mxu0 %v714
    %v782 = vpop.f32.mrf.mxu0
    %v783 = vadd.f32 0.0, %v782
    %v784 = vpop.f32.mrf.mxu0
    %785 = vdwg.mxu0
    %v786 = vmax.f32 %v594, 0.0
    %v787 = vmax.f32 %v783, 0.0
    %788 = vst.msk [vmem:[%s9] sm:$0xff] %vm116, %v786
    %789 = vst.msk [vmem:[%s9 + $0x8] sm:$0xff] %vm116, %v787
    // Predicated region
    $region58: #{self_attention_forward.1} parent=1 // pred_check
      _
    $region59: #{self_attention_forward.1} parent=1 // pred_check_branch
      %791 = sbr.rel (0) target = $region61
    $region60: #{self_attention_forward.1} parent=1 // pred_region
      _
    $region61: #{self_attention_forward.1} parent=1 // pred_fallthru
      _
    // Predicated region
    $region62: #{self_attention_forward.1} parent=1 // pred_check
      _
    $region63: #{self_attention_forward.1} parent=1 // pred_check_branch
      %793 = sbr.rel (0) target = $region65
    $region64: #{self_attention_forward.1} parent=1 // pred_region
      _
    $region65: #{self_attention_forward.1} parent=1 // pred_fallthru
      _
    %794 = vsyncpa [#allocation3], 1
    %795 = vsyncpa [#allocation5], 1
    %796 = vsyncpa [#allocation8], 1

</llo_original>
